<compile_context>
chip_gen: v5e
topology: v5e:2x2
jax: 0.10.0
libtpu: 0.0.40
codegen_flags: <defaults>
</compile_context>

<pallas_src>
import jax
import jax.numpy as jnp
from jax.experimental import pallas as pl
from jax.experimental.pallas import tpu as pltpu


def critic_mlp_kernel(x_ref, w1_ref, b1_ref, w2_ref, b2_ref, w3_ref, b3_ref,
                      o_ref):
    # Shapes (per grid step):
    #   x_ref : (D, TM)      -- X^T tile, batch on the lane axis
    #   w1_ref: (64, D)      b1_ref: (64, 1)
    #   w2_ref: (32, 64)     b2_ref: (32, 1)
    #   w3_ref: (32, 1)      b3_ref: (1, 1) scalar in SMEM
    #   o_ref : (1, TM)
    x = x_ref[...]

    # Layer 1: (64, D) @ (D, TM) -> (64, TM), f32 accumulation on the MXU.
    h1 = jnp.dot(w1_ref[...], x, preferred_element_type=jnp.float32)
    h1 = jnp.tanh(h1 + b1_ref[...])                       # f32 VPU/EUP math

    # Layer 2: (32, 64) @ (64, TM) -> (32, TM).
    h2 = jnp.dot(w2_ref[...], h1.astype(w2_ref.dtype),
                 preferred_element_type=jnp.float32)
    h2 = jnp.tanh(h2 + b2_ref[...])

    # Layer 3 (32 -> 1): VPU multiply + sublane reduce instead of an N=1
    # MXU matmul; add the scalar bias read from SMEM.
    out = jnp.sum(h2 * w3_ref[...], axis=0, keepdims=True) + b3_ref[0, 0]

    o_ref[...] = out.astype(o_ref.dtype)                   # (1, TM) lane-dense


def critic_forward(x, params, *, block_b=512, input_dtype=None):
    """Fused Critic MLP forward pass.

    x: (B, state_dim) float32, PyTorch nn.Linear layout.
    params: (w1, b1, w2, b2, w3, b3) with w* stored (in, out), b* 1-D.
    block_b: batch tile size (multiple of 128).
    input_dtype: optional dtype (e.g. jnp.bfloat16) for X/W1/W2 streaming;
                 accumulation and activations remain float32.
    Returns (B, 1) float32.
    """
    w1, b1, w2, b2, w3, b3 = params
    B, D = x.shape
    H1 = w1.shape[1]          # 64
    H2 = w2.shape[1]          # 32

    assert block_b % 128 == 0, "block_b must be a multiple of 128"
    cdt = jnp.float32 if input_dtype is None else input_dtype

    # Batch tile: multiple of 128 lanes, no bigger than the (padded) batch.
    tm = int(min(block_b, 128 * pl.cdiv(B, 128)))
    b_pad = int(tm * pl.cdiv(B, tm))

    # Lane-dense layout plumbing (wrapper side): X^T, padded along batch.
    xt = jnp.transpose(x).astype(cdt)                       # (D, B)
    if b_pad != B:
        xt = jnp.pad(xt, ((0, 0), (0, b_pad - B)))          # (D, B_pad)

    w1t = jnp.transpose(w1).astype(cdt)                     # (64, D)
    w2t = jnp.transpose(w2).astype(cdt)                     # (32, 64)
    b1c = b1.reshape(H1, 1).astype(jnp.float32)             # (64, 1)
    b2c = b2.reshape(H2, 1).astype(jnp.float32)             # (32, 1)
    w3c = w3.reshape(H2, 1).astype(jnp.float32)             # (32, 1)
    b3s = b3.reshape(1, 1).astype(jnp.float32)              # (1, 1) -> SMEM

    grid = (b_pad // tm,)

    # Weights/biases: constant block index -> fetched once, VMEM-resident.
    resident = lambda shape: pl.BlockSpec(shape, lambda i: (0, 0))

    out_t = pl.pallas_call(
        critic_mlp_kernel,
        out_shape=jax.ShapeDtypeStruct((1, b_pad), jnp.float32),
        grid=grid,
        in_specs=[
            pl.BlockSpec((D, tm), lambda i: (0, i)),        # X^T batch tiles
            resident((H1, D)),                              # W1^T
            resident((H1, 1)),                              # b1
            resident((H2, H1)),                             # W2^T
            resident((H2, 1)),                              # b2
            resident((H2, 1)),                              # w3 column
            pl.BlockSpec(memory_space=pltpu.MemorySpace.SMEM),  # b3 scalar
        ],
        out_specs=pl.BlockSpec((1, tm), lambda i: (0, i)),  # lane-dense output
        compiler_params=pltpu.CompilerParams(
            dimension_semantics=("parallel",)),
    )(xt, w1t, b1c, w2t, b2c, w3c, b3s)

    return out_t[0, :B].reshape(B, 1)


def init_critic_params(key, state_dim):
    """Deterministic init mimicking PyTorch's default Linear init
    (uniform in [-1/sqrt(fan_in), 1/sqrt(fan_in)]); weights stored (in, out)."""
    dims = [(state_dim, 64), (64, 32), (32, 1)]
    params = []
    for (fan_in, fan_out) in dims:
        key, kw, kb = jax.random.split(key, 3)
        bound = 1.0 / jnp.sqrt(float(fan_in))
        w = jax.random.uniform(kw, (fan_in, fan_out), jnp.float32,
                               minval=-bound, maxval=bound)
        b = jax.random.uniform(kb, (fan_out,), jnp.float32,
                               minval=-bound, maxval=bound)
        params += [w, b]
    return tuple(params)


def critic_reference(x, params):
    """Plain-JAX reference for correctness checking."""
    w1, b1, w2, b2, w3, b3 = params
    h1 = jnp.tanh(x @ w1 + b1)
    h2 = jnp.tanh(h1 @ w2 + b2)
    return h2 @ w3 + b3


if __name__ == "__main__":
    key = jax.random.PRNGKey(0)
    key, kx, kp = jax.random.split(key, 3)

    batch = 8
    state_dim = 16

    x = jax.random.normal(kx, (batch, state_dim), jnp.float32)
    params = init_critic_params(kp, state_dim)

    # Small-batch correctness check (single grid step, f32).
    out = jax.block_until_ready(critic_forward(x, params))
    ref = critic_reference(x, params)
    assert out.shape == (batch, 1)
    assert jnp.allclose(out, ref, atol=1e-5, rtol=1e-5), (
        f"mismatch: max abs err {jnp.max(jnp.abs(out - ref))}")

    # Multi-tile grid + batch padding path (B not a multiple of the tile).
    key, kx2 = jax.random.split(key)
    x2 = jax.random.normal(kx2, (300, state_dim), jnp.float32)
    out2 = jax.block_until_ready(critic_forward(x2, params, block_b=256))
    ref2 = critic_reference(x2, params)
    assert out2.shape == (300, 1)
    assert jnp.allclose(out2, ref2, atol=1e-5, rtol=1e-5), (
        f"mismatch (tiled): max abs err {jnp.max(jnp.abs(out2 - ref2))}")

    # bf16 input streaming (v6e/v7x HBM saver); accumulation stays f32.
    out3 = jax.block_until_ready(
        critic_forward(x2, params, block_b=256, input_dtype=jnp.bfloat16))
    assert jnp.allclose(out3, ref2, atol=5e-2, rtol=5e-2), (
        f"mismatch (bf16): max abs err {jnp.max(jnp.abs(out3 - ref2))}")

    print("KERNEL_OK")
</pallas_src>

<mosaic_0001>
module attributes {stable_mosaic.version = 11 : i64} {
  func.func @critic_mlp_kernel(%arg0: i32, %arg1: memref<16x128xf32, #tpu.memory_space<vmem>>, %arg2: memref<64x16xf32, #tpu.memory_space<vmem>>, %arg3: memref<64x1xf32, #tpu.memory_space<vmem>>, %arg4: memref<32x64xf32, #tpu.memory_space<vmem>>, %arg5: memref<32x1xf32, #tpu.memory_space<vmem>>, %arg6: memref<32x1xf32, #tpu.memory_space<vmem>>, %arg7: memref<1x1xf32, #tpu.memory_space<smem>>, %arg8: memref<1x128xf32, #tpu.memory_space<vmem>>) attributes {dimension_semantics = [#tpu.dimension_semantics<parallel>], iteration_bounds = array<i64: 1>, scalar_prefetch = 0 : i64, scratch_operands = 0 : i64, tpu.core_type = #tpu.core_type<tc>, window_params = [{transform_indices = @transform_0, window_bounds = array<i64: 16, 128>}, {pipeline_mode = #tpu.pipeline_mode<synchronous>, transform_indices = @transform_1, window_bounds = array<i64: 64, 16>}, {pipeline_mode = #tpu.pipeline_mode<synchronous>, transform_indices = @transform_2, window_bounds = array<i64: 64, 1>}, {pipeline_mode = #tpu.pipeline_mode<synchronous>, transform_indices = @transform_3, window_bounds = array<i64: 32, 64>}, {pipeline_mode = #tpu.pipeline_mode<synchronous>, transform_indices = @transform_4, window_bounds = array<i64: 32, 1>}, {pipeline_mode = #tpu.pipeline_mode<synchronous>, transform_indices = @transform_5, window_bounds = array<i64: 32, 1>}, {transform_indices = @transform_6, window_bounds = array<i64: 1, 1>}, {transform_indices = @transform_7, window_bounds = array<i64: 1, 128>}]} {
    %c0 = arith.constant 0 : index
    %c0_0 = arith.constant 0 : index
    %0 = vector.load %arg1[%c0, %c0_0] : memref<16x128xf32, #tpu.memory_space<vmem>>, vector<16x128xf32>
    %c0_1 = arith.constant 0 : index
    %c0_2 = arith.constant 0 : index
    %1 = vector.load %arg2[%c0_1, %c0_2] : memref<64x16xf32, #tpu.memory_space<vmem>>, vector<64x16xf32>
    %cst = arith.constant dense<0.000000e+00> : vector<64x128xf32>
    %2 = tpu.matmul %1, %0, %cst {dimension_numbers = #tpu.dot_dimension_numbers<[1], [0], [0], [1], [0, 0, 1, 1], [], []>} : vector<64x16xf32>, vector<16x128xf32>, vector<64x128xf32> -> vector<64x128xf32>
    %c0_3 = arith.constant 0 : index
    %c0_4 = arith.constant 0 : index
    %3 = vector.load %arg3[%c0_3, %c0_4] : memref<64x1xf32, #tpu.memory_space<vmem>>, vector<64x1xf32>
    %4 = vector.broadcast %3 : vector<64x1xf32> to vector<64x128xf32>
    %5 = arith.addf %2, %4 : vector<64x128xf32>
    %6 = math.tanh %5 : vector<64x128xf32>
    %c0_5 = arith.constant 0 : index
    %c0_6 = arith.constant 0 : index
    %7 = vector.load %arg4[%c0_5, %c0_6] : memref<32x64xf32, #tpu.memory_space<vmem>>, vector<32x64xf32>
    %cst_7 = arith.constant dense<0.000000e+00> : vector<32x128xf32>
    %8 = tpu.matmul %7, %6, %cst_7 {dimension_numbers = #tpu.dot_dimension_numbers<[1], [0], [0], [1], [0, 0, 1, 1], [], []>} : vector<32x64xf32>, vector<64x128xf32>, vector<32x128xf32> -> vector<32x128xf32>
    %c0_8 = arith.constant 0 : index
    %c0_9 = arith.constant 0 : index
    %9 = vector.load %arg5[%c0_8, %c0_9] : memref<32x1xf32, #tpu.memory_space<vmem>>, vector<32x1xf32>
    %10 = vector.broadcast %9 : vector<32x1xf32> to vector<32x128xf32>
    %11 = arith.addf %8, %10 : vector<32x128xf32>
    %12 = math.tanh %11 : vector<32x128xf32>
    %c0_10 = arith.constant 0 : index
    %c0_11 = arith.constant 0 : index
    %13 = vector.load %arg6[%c0_10, %c0_11] : memref<32x1xf32, #tpu.memory_space<vmem>>, vector<32x1xf32>
    %14 = vector.broadcast %13 : vector<32x1xf32> to vector<32x128xf32>
    %15 = arith.mulf %12, %14 : vector<32x128xf32>
    %cst_12 = arith.constant dense<0.000000e+00> : vector<128xf32>
    %16 = vector.multi_reduction <add>, %15, %cst_12 [0] : vector<32x128xf32> to vector<128xf32>
    %17 = vector.shape_cast %16 : vector<128xf32> to vector<1x128xf32>
    %c0_13 = arith.constant 0 : index
    %c0_14 = arith.constant 0 : index
    %18 = memref.load %arg7[%c0_13, %c0_14] : memref<1x1xf32, #tpu.memory_space<smem>>
    %19 = vector.broadcast %18 : f32 to vector<1x128xf32>
    %20 = arith.addf %17, %19 : vector<1x128xf32>
    %c0_15 = arith.constant 0 : index
    %c0_16 = arith.constant 0 : index
    %21 = vector.load %arg8[%c0_15, %c0_16] : memref<1x128xf32, #tpu.memory_space<vmem>>, vector<1x128xf32>
    tpu.vector_store %arg8[%c0_15, %c0_16], %20 {strides = array<i32>} : memref<1x128xf32, #tpu.memory_space<vmem>>, vector<1x128xf32>,
    return
  }
  func.func @transform_0(%arg0: i32) -> (i32, i32) {
    %c0_i32 = arith.constant 0 : i32
    %c0_i32_0 = arith.constant 0 : i32
    return %c0_i32, %arg0 : i32, i32
  }
  func.func @transform_1(%arg0: i32) -> (i32, i32) {
    %c0_i32 = arith.constant 0 : i32
    %c0_i32_0 = arith.constant 0 : i32
    %c0_i32_1 = arith.constant 0 : i32
    return %c0_i32, %c0_i32_0 : i32, i32
  }
  func.func @transform_2(%arg0: i32) -> (i32, i32) {
    %c0_i32 = arith.constant 0 : i32
    %c0_i32_0 = arith.constant 0 : i32
    %c0_i32_1 = arith.constant 0 : i32
    return %c0_i32, %c0_i32_0 : i32, i32
  }
  func.func @transform_3(%arg0: i32) -> (i32, i32) {
    %c0_i32 = arith.constant 0 : i32
    %c0_i32_0 = arith.constant 0 : i32
    %c0_i32_1 = arith.constant 0 : i32
    return %c0_i32, %c0_i32_0 : i32, i32
  }
  func.func @transform_4(%arg0: i32) -> (i32, i32) {
    %c0_i32 = arith.constant 0 : i32
    %c0_i32_0 = arith.constant 0 : i32
    %c0_i32_1 = arith.constant 0 : i32
    return %c0_i32, %c0_i32_0 : i32, i32
  }
  func.func @transform_5(%arg0: i32) -> (i32, i32) {
    %c0_i32 = arith.constant 0 : i32
    %c0_i32_0 = arith.constant 0 : i32
    %c0_i32_1 = arith.constant 0 : i32
    return %c0_i32, %c0_i32_0 : i32, i32
  }
  func.func @transform_6(%arg0: i32) -> (i32, i32) {
    %c0_i32 = arith.constant 0 : i32
    %c0_i32_0 = arith.constant 0 : i32
    %c0_i32_1 = arith.constant 0 : i32
    return %c0_i32, %c0_i32_0 : i32, i32
  }
  func.func @transform_7(%arg0: i32) -> (i32, i32) {
    %c0_i32 = arith.constant 0 : i32
    %c0_i32_0 = arith.constant 0 : i32
    return %c0_i32, %arg0 : i32, i32
  }
}

</mosaic_0001>

<llo_original>
// kernel: tpu_custom_call.1
$region0: #{tpu_custom_call.1}
  #allocation0 [shape = 'u32[]', space=smem, size = 0x4, offset = 0x4, fixed_abs, tag = 'smem constant byte address 0x4 - core index']
  #allocation1 [shape = 'u32[72,128]{1,0:T(1,128)}', space=vmem, size = 0x9000, scoped, tag = 'internal scratch']
  #allocation2 [shape = 'f32[1,1]{1,0:T(1,128)S(6)}', space=smem, size = 0x200, scoped, tag = 'scoped memory for tpu_custom_call.1']
  %s0 = inlined_call_operand.vmem [shape: f32[16,128], index: 0, kind: input, shape index: {}]
  %s1 = inlined_call_operand.vmem [shape: f32[64,16], index: 1, kind: input, shape index: {}]
  %s2 = inlined_call_operand.vmem [shape: f32[64,1], index: 2, kind: input, shape index: {}]
  %s3 = inlined_call_operand.vmem [shape: f32[32,64], index: 3, kind: input, shape index: {}]
  %s4 = inlined_call_operand.vmem [shape: f32[32,1], index: 4, kind: input, shape index: {}]
  %s5 = inlined_call_operand.vmem [shape: f32[32,1], index: 5, kind: input, shape index: {}]
  %s6 = inlined_call_operand.<no memory space> [shape: f32[1,1], index: 6, kind: input, shape index: {}]
  %s7 = inlined_call_operand.hbm [shape: f32[1,128], index: 7, kind: output, shape index: {}]
  %s8 = sld [smem:[#allocation0]]
  $region38: #{tpu_custom_call.1} parent=0
    _
  %s10 = ssub.s32 1, %s8
  %s11 = scalar_select 0, %s10, %s8
  %12 = sst [smem:[#allocation2]] %s6
  $region1: #{tpu_custom_call.1} parent=0
    #allocation3 [shape = 'u8[512]{0}', space=vmem, size = 0x400, scoped, tag = 'output window, operand 0, single buffered']
    #allocation4 [shape = 's32[1]{0}', space=sflag, size = 0x4, scoped, tag = 'scoped memory for tpu_custom_call.1']
    %13 = vsyncpa [#allocation4], 0
    // Predicated region
    $region2: #{tpu_custom_call.1} parent=1 // pred_check
      _
    $region3: #{tpu_custom_call.1} parent=1 // pred_check_branch
      %15 = sbr.rel (0) target = $region5
    $region4: #{tpu_custom_call.1} parent=1 // pred_region
      _
    $region5: #{tpu_custom_call.1} parent=1 // pred_fallthru
      _
    // Predicated region
    $region6: #{tpu_custom_call.1} parent=1 // pred_check
      _
    $region7: #{tpu_custom_call.1} parent=1 // pred_check_branch
      %17 = sbr.rel (0) target = $region9
    $region8: #{tpu_custom_call.1} parent=1 // pred_region
      _
    $region9: #{tpu_custom_call.1} parent=1 // pred_fallthru
      _
    // Predicated region
    $region10: #{tpu_custom_call.1} parent=1 // pred_check
      _
    $region11: #{tpu_custom_call.1} parent=1 // pred_check_branch
      %19 = sbr.rel (0) target = $region13
    $region12: #{tpu_custom_call.1} parent=1 // pred_region
      _
    $region13: #{tpu_custom_call.1} parent=1 // pred_fallthru
      _
    // Predicated region
    $region14: #{tpu_custom_call.1} parent=1 // pred_check
      _
    $region15: #{tpu_custom_call.1} parent=1 // pred_check_branch
      %21 = sbr.rel (0) target = $region17
    $region16: #{tpu_custom_call.1} parent=1 // pred_region
      _
    $region17: #{tpu_custom_call.1} parent=1 // pred_fallthru
      _
    // Predicated region
    $region18: #{tpu_custom_call.1} parent=1 // pred_check
      _
    $region19: #{tpu_custom_call.1} parent=1 // pred_check_branch
      %23 = sbr.rel (0) target = $region21
    $region20: #{tpu_custom_call.1} parent=1 // pred_region
      _
    $region21: #{tpu_custom_call.1} parent=1 // pred_fallthru
      _
    // Predicated region
    $region22: #{tpu_custom_call.1} parent=1 // pred_check
      _
    $region23: #{tpu_custom_call.1} parent=1 // pred_check_branch
      %25 = sbr.rel (0) target = $region25
    $region24: #{tpu_custom_call.1} parent=1 // pred_region
      _
    $region25: #{tpu_custom_call.1} parent=1 // pred_fallthru
      _
    // Predicated region
    $region26: #{tpu_custom_call.1} parent=1 // pred_check
      _
    $region27: #{tpu_custom_call.1} parent=1 // pred_check_branch
      %27 = sbr.rel (0) target = $region29
    $region28: #{tpu_custom_call.1} parent=1 // pred_region
      _
    $region29: #{tpu_custom_call.1} parent=1 // pred_fallthru
      _
    %v28 = vld [vmem:[%s0] sm:$0xff]
    %v29 = vld [vmem:[%s0 + $0x8] sm:$0xff]
    %v30 = vld [vmem:[%s1] sm:$0xff]
    %v31 = vld [vmem:[%s1 + $0x8] sm:$0xff]
    %v32 = vld [vmem:[%s1 + $0x10] sm:$0xff]
    %v33 = vld [vmem:[%s1 + $0x18] sm:$0xff]
    %v34 = vld [vmem:[%s1 + $0x20] sm:$0xff]
    %v35 = vld [vmem:[%s1 + $0x28] sm:$0xff]
    %v36 = vld [vmem:[%s1 + $0x30] sm:$0xff]
    %v37 = vld [vmem:[%s1 + $0x38] sm:$0xff]
    %v38 = vld [vmem:[%s2] sm:$0xff]
    %v39 = vld [vmem:[%s2 + $0x8] sm:$0xff]
    %v40 = vld [vmem:[%s2 + $0x10] sm:$0xff]
    %v41 = vld [vmem:[%s2 + $0x18] sm:$0xff]
    %v42 = vld [vmem:[%s2 + $0x20] sm:$0xff]
    %v43 = vld [vmem:[%s2 + $0x28] sm:$0xff]
    %v44 = vld [vmem:[%s2 + $0x30] sm:$0xff]
    %v45 = vld [vmem:[%s2 + $0x38] sm:$0xff]
    %47 = vset.pattern.permute.xlu0 0
    %48 = vperm.xlu0 %47, %v38
    %v49 = vpop.permute.xlu0 %48
    %52 = vset.pattern.permute.xlu0 0
    %53 = vperm.xlu0 %52, %v39
    %v54 = vpop.permute.xlu0 %53
    %57 = vset.pattern.permute.xlu0 0
    %58 = vperm.xlu0 %57, %v40
    %v59 = vpop.permute.xlu0 %58
    %62 = vset.pattern.permute.xlu0 0
    %63 = vperm.xlu0 %62, %v41
    %v64 = vpop.permute.xlu0 %63
    %67 = vset.pattern.permute.xlu0 0
    %68 = vperm.xlu0 %67, %v42
    %v69 = vpop.permute.xlu0 %68
    %72 = vset.pattern.permute.xlu0 0
    %73 = vperm.xlu0 %72, %v43
    %v74 = vpop.permute.xlu0 %73
    %77 = vset.pattern.permute.xlu0 0
    %78 = vperm.xlu0 %77, %v44
    %v79 = vpop.permute.xlu0 %78
    %82 = vset.pattern.permute.xlu0 0
    %83 = vperm.xlu0 %82, %v45
    %v84 = vpop.permute.xlu0 %83
    %vm86 = vcmask 130048
    %v88 = vsel %vm86, %v30, 0
    %v91 = vsel %vm86, %v31, 0
    %v94 = vsel %vm86, %v32, 0
    %v97 = vsel %vm86, %v33, 0
    %v100 = vsel %vm86, %v34, 0
    %v103 = vsel %vm86, %v35, 0
    %v106 = vsel %vm86, %v36, 0
    %v109 = vsel %vm86, %v37, 0
    %111 = vmatpush.msra.mxu0 0.0
    %112 = vmatpush.msra.mxu0 0.0
    %113 = vmatpush.msra.mxu0 0.0
    %114 = vmatpush.msra.mxu0 0.0
    %115 = vmatpush.msra.mxu0 0.0
    %116 = vmatpush.msra.mxu0 0.0
    %117 = vmatpush.msra.mxu0 0.0
    %118 = vmatpush.msra.mxu0 0.0
    %119 = vmatpush.msra.mxu0 0.0
    %120 = vmatpush.msra.mxu0 0.0
    %121 = vmatpush.msra.mxu0 0.0
    %122 = vmatpush.msra.mxu0 0.0
    %123 = vmatpush.msra.mxu0 0.0
    %124 = vmatpush.msra.mxu0 0.0
    %125 = vmatpush.msra.mxu0 %v29
    %126 = vmatpush.msra.mxu0 %v28
    %127 = vmatmul.f32.gmra.mxu0 %v88
    %v128 = vpop.f32.mrf.mxu0
    %v129 = vadd.f32 %v49, %v128
    %130 = vmatmul.f32.gmra.mxu0 %v91
    %v131 = vpop.f32.mrf.mxu0
    %v132 = vadd.f32 %v54, %v131
    %133 = vmatmul.f32.gmra.mxu0 %v94
    %v134 = vpop.f32.mrf.mxu0
    %v135 = vadd.f32 %v59, %v134
    %136 = vmatmul.f32.gmra.mxu0 %v97
    %v137 = vpop.f32.mrf.mxu0
    %v138 = vadd.f32 %v64, %v137
    %139 = vmatmul.f32.gmra.mxu0 %v100
    %v140 = vpop.f32.mrf.mxu0
    %v141 = vadd.f32 %v69, %v140
    %142 = vmatmul.f32.gmra.mxu0 %v103
    %v143 = vpop.f32.mrf.mxu0
    %v144 = vadd.f32 %v74, %v143
    %145 = vmatmul.f32.gmra.mxu0 %v106
    %v146 = vpop.f32.mrf.mxu0
    %v147 = vadd.f32 %v79, %v146
    %148 = vmatmul.f32.gmra.mxu0 %v109
    %v149 = vpop.f32.mrf.mxu0
    %v150 = vadd.f32 %v84, %v149
    %151 = vdwg.mxu0
    %v152 = vtanh.pop %v129
    %v153 = vtanh.pop %v132
    %v154 = vtanh.pop %v135
    %v155 = vtanh.pop %v138
    %v156 = vtanh.pop %v141
    %v157 = vtanh.pop %v144
    %v158 = vtanh.pop %v147
    %v159 = vtanh.pop %v150
    %v160 = vld [vmem:[%s3] sm:$0xff]
    %v161 = vld [vmem:[%s3 + $0x8] sm:$0xff]
    %v162 = vld [vmem:[%s3 + $0x10] sm:$0xff]
    %v163 = vld [vmem:[%s3 + $0x18] sm:$0xff]
    %v164 = vld [vmem:[%s4] sm:$0xff]
    %v165 = vld [vmem:[%s4 + $0x8] sm:$0xff]
    %v166 = vld [vmem:[%s4 + $0x10] sm:$0xff]
    %v167 = vld [vmem:[%s4 + $0x18] sm:$0xff]
    %169 = vset.pattern.permute.xlu0 0
    %170 = vperm.xlu0 %169, %v164
    %v171 = vpop.permute.xlu0 %170
    %174 = vset.pattern.permute.xlu0 0
    %175 = vperm.xlu0 %174, %v165
    %v176 = vpop.permute.xlu0 %175
    %179 = vset.pattern.permute.xlu0 0
    %180 = vperm.xlu0 %179, %v166
    %v181 = vpop.permute.xlu0 %180
    %184 = vset.pattern.permute.xlu0 0
    %185 = vperm.xlu0 %184, %v167
    %v186 = vpop.permute.xlu0 %185
    %vm188 = vcmask 523264
    %v190 = vsel %vm188, %v160, 0
    %v193 = vsel %vm188, %v161, 0
    %v196 = vsel %vm188, %v162, 0
    %v199 = vsel %vm188, %v163, 0
    %201 = vmatpush.msra.mxu0 0.0
    %202 = vmatpush.msra.mxu0 0.0
    %203 = vmatpush.msra.mxu0 0.0
    %204 = vmatpush.msra.mxu0 0.0
    %205 = vmatpush.msra.mxu0 0.0
    %206 = vmatpush.msra.mxu0 0.0
    %207 = vmatpush.msra.mxu0 0.0
    %208 = vmatpush.msra.mxu0 0.0
    %209 = vmatpush.msra.mxu0 %v159
    %210 = vmatpush.msra.mxu0 %v158
    %211 = vmatpush.msra.mxu0 %v157
    %212 = vmatpush.msra.mxu0 %v156
    %213 = vmatpush.msra.mxu0 %v155
    %214 = vmatpush.msra.mxu0 %v154
    %215 = vmatpush.msra.mxu0 %v153
    %216 = vmatpush.msra.mxu0 %v152
    %217 = vmatmul.f32.gmra.mxu0 %v190
    %v218 = vpop.f32.mrf.mxu0
    %v219 = vadd.f32 %v171, %v218
    %220 = vmatmul.f32.gmra.mxu0 %v193
    %v221 = vpop.f32.mrf.mxu0
    %v222 = vadd.f32 %v176, %v221
    %223 = vmatmul.f32.gmra.mxu0 %v196
    %v224 = vpop.f32.mrf.mxu0
    %v225 = vadd.f32 %v181, %v224
    %226 = vmatmul.f32.gmra.mxu0 %v199
    %v227 = vpop.f32.mrf.mxu0
    %v228 = vadd.f32 %v186, %v227
    %229 = vdwg.mxu0
    %v230 = vtanh.pop %v219
    %v231 = vtanh.pop %v222
    %v232 = vtanh.pop %v225
    %v233 = vtanh.pop %v228
    %v234 = vld [vmem:[%s5] sm:$0xff]
    %v235 = vld [vmem:[%s5 + $0x8] sm:$0xff]
    %v236 = vld [vmem:[%s5 + $0x10] sm:$0xff]
    %v237 = vld [vmem:[%s5 + $0x18] sm:$0xff]
    %239 = vset.pattern.permute.xlu0 0
    %240 = vperm.xlu0 %239, %v234
    %v241 = vpop.permute.xlu0 %240
    %244 = vset.pattern.permute.xlu0 0
    %245 = vperm.xlu0 %244, %v235
    %v246 = vpop.permute.xlu0 %245
    %249 = vset.pattern.permute.xlu0 0
    %250 = vperm.xlu0 %249, %v236
    %v251 = vpop.permute.xlu0 %250
    %254 = vset.pattern.permute.xlu0 0
    %255 = vperm.xlu0 %254, %v237
    %v256 = vpop.permute.xlu0 %255
    %v258 = vmul.f32 %v230, %v241
    %v259 = vmul.f32 %v231, %v246
    %v260 = vmul.f32 %v232, %v251
    %v261 = vmul.f32 %v233, %v256
    %v262 = vadd.f32 %v258, %v259
    %v263 = vadd.f32 %v262, %v260
    %v264 = vadd.f32 %v263, %v261
    %v265 = vrot.slane %v264, 4
    %v266 = vadd.f32 %v264, %v265
    %v267 = vrot.slane %v266, 2
    %v268 = vadd.f32 %v266, %v267
    %v269 = vrot.slane %v268, 1
    %v270 = vadd.f32 %v268, %v269
    %s271 = sld [smem:[#allocation2]]
    %v272 = vstv %s271
    %v273 = vadd.f32 %v270, %v272
    %274 = vst [vmem:[#allocation3] sm:$0x1] %v273
    // Predicated region
    $region30: #{tpu_custom_call.1} parent=1 // pred_check
      _
    $region31: #{tpu_custom_call.1} parent=1 // pred_check_branch
      %276 = sbr.rel (0) target = $region33
    $region32: #{tpu_custom_call.1} parent=1 // pred_region
      %278 = vsyncadd [#allocation4], 0
      %s280 = sshll.u32 [#allocation3], 4
      %s281 = int_to_ptr.vmem [resolvable:$true] %s280
      %s282 = sshll.u32 %s7, 4
      %s283 = int_to_ptr.hbm [resolvable:$true] %s282
      %285 = dma.vmem_to_hbm [thread:$0]  %s281, 16, %s283, [#allocation4]
    $region33: #{tpu_custom_call.1} parent=1 // pred_fallthru
      _
    // Predicated region
    $region34: #{tpu_custom_call.1} parent=1 // pred_check
      _
    $region35: #{tpu_custom_call.1} parent=1 // pred_check_branch
      %287 = sbr.rel (0) target = $region37
    $region36: #{tpu_custom_call.1} parent=1 // pred_region
      %289 = dma.done [#allocation4], 16
    $region37: #{tpu_custom_call.1} parent=1 // pred_fallthru
      _
    %290 = vsyncpa [#allocation4], 1

</llo_original>
